<compile_context>
chip_gen: v5e
topology: v5e:2x2
jax: 0.10.0
libtpu: 0.0.40
codegen_flags: <defaults>
</compile_context>

<pallas_src>
import jax
import jax.numpy as jnp
from jax.experimental import pallas as pl
from jax.experimental.pallas import tpu as pltpu

IGNORE_INDEX = 255
ROW_ALIGN = 32          # lcm of f32 (8,128) / bf16 (16,128) / int8-u8 (32,128) sublane tiles
MAX_T_ROWS = 512
T_ROWS_TARGET = 256
MAX_C_TILE = 32         # bound on trace-time unroll of the per-class loop


def _tpu_vmem_bytes():
    """Physical VMEM per TensorCore (generation-aware), with conservative fallbacks."""
    try:
        v = int(pltpu.get_tpu_info().vmem_capacity_bytes)
        if v > 0:
            return v
    except Exception:
        pass
    try:
        kind = jax.devices()[0].device_kind.lower()
    except Exception:
        kind = ""
    if "v7" in kind:
        return 64 * 1024 * 1024
    if "v5" in kind or "v6" in kind:
        return 128 * 1024 * 1024
    return 64 * 1024 * 1024  # unknown: assume the smaller (v7x-like) VMEM


def _num_tensorcores():
    """Shard the leading grid axis only on multi-TensorCore (megacore) chips."""
    try:
        kind = jax.devices()[0].device_kind.lower()
    except Exception:
        return 1
    if "v7" in kind or "v4" in kind or "v5p" in kind:
        return 2
    return 1


def _make_ce2d_kernel(c_tile, c_pad):
    # If any (possibly padded) class id could collide with ignore_index, remap ignored
    # pixels to -1 so they never match a class (matches PyTorch: 255 is always ignored).
    guard_ignore = c_pad > IGNORE_INDEX

    def kernel(x_ref, t_ref, out_ref):
        # x_ref  : (N, c_tile, T, 128) native dtype (f32/bf16) in VMEM
        # t_ref  : (N, T, 128)         uint8/int32 class ids in VMEM
        # out_ref: (1, 2, T, 128)      f32 per-lane [loss_sum, valid_count], resident
        #          across the pixel-tile (grid axis 1) and class-tile (grid axis 2) axes.
        i = pl.program_id(1)
        c = pl.program_id(2)

        @pl.when(jnp.logical_and(i == 0, c == 0))
        def _():
            out_ref[...] = jnp.zeros_like(out_ref)

        t_raw = t_ref[...].astype(jnp.int32)                    # (N, T, 128)
        if guard_ignore:
            t_cls = jnp.where(t_raw == IGNORE_INDEX, jnp.int32(-1), t_raw)
        else:
            t_cls = t_raw

        c_base = c * c_tile
        loss_rows = jnp.zeros(out_ref.shape[2:], jnp.float32)   # (T, 128)

        # Unrolled per-class loop: compares against a scalar class id, working set stays
        # (N, T, 128) per class (no full (N,C,T,128) iota / mask / x-lse temporaries).
        for j in range(c_tile):
            x_j = x_ref[:, j].astype(jnp.float32)               # (N, T, 128) f32 compute
            m_j = jnp.max(x_j, axis=0, keepdims=True)           # (1, T, 128)
            # log_softmax over dim=0 (batch), matching F.log_softmax(inputs, dim=0)
            lse_j = m_j + jnp.log(jnp.sum(jnp.exp(x_j - m_j), axis=0, keepdims=True))
            hit = t_cls == (c_base + j)                         # (N, T, 128)
            # ignore_index / padded pixels never hit any class -> contribute exactly 0.
            loss_rows = loss_rows + jnp.sum(jnp.where(hit, lse_j - x_j, 0.0), axis=0)

        out_ref[0, 0] += loss_rows

        @pl.when(c == 0)  # count each pixel tile exactly once
        def _():
            valid = t_raw != IGNORE_INDEX
            out_ref[0, 1] += jnp.sum(valid.astype(jnp.float32), axis=0)

    return kernel


def cross_entropy_loss_2d(inputs, targets, *, c_tile=None, t_rows=None):
    """inputs: (N, C, H, W) float (f32/bf16); targets: (N, H, W) int class ids (255 = ignore)."""
    N, C, H, W = inputs.shape
    HW = H * W
    xbytes = inputs.dtype.itemsize

    # 1-byte targets in HBM when class ids (and 255) fit; widened to int32 in-kernel.
    t_dtype = jnp.uint8 if C <= 255 else jnp.int32
    tbytes = jnp.dtype(t_dtype).itemsize

    # Generation-aware VMEM budget (v7x: 64 MiB physical; v5e/v6e: 128 MiB).
    vmem = _tpu_vmem_bytes()
    vmem_limit = min(vmem * 3 // 4, 100 * 1024 * 1024)   # ~48 MiB on v7x, 96 MiB on v5e/v6e
    budget = vmem_limit * 4 // 5                          # headroom for compiler scratch

    # Class tiling decouples the pixel-tile row count from C: keep one x buffer near a
    # few-MiB target at the target row count.
    if c_tile is None:
        x_block_target = min(8 * 1024 * 1024, budget // 6)
        c_tile = max(1, x_block_target // max(1, N * T_ROWS_TARGET * 128 * xbytes))
        c_tile = min(C, c_tile, MAX_C_TILE)
    c_tile = max(1, min(int(c_tile), C))
    c_steps = -(-C // c_tile)
    c_pad = c_steps * c_tile

    # Pixel-tile rows: biggest that fits the live-VMEM budget
    # (2x double-buffered native x block + 2x t block + f32 per-class temps + accumulator).
    if t_rows is None:
        per_row = (2 * N * c_tile * 128 * xbytes
                   + 2 * N * 128 * tbytes
                   + 10 * N * 128 * 4
                   + 4 * 2 * 128 * 4)
        t_rows = max(ROW_ALIGN,
                     min(MAX_T_ROWS, budget // per_row // ROW_ALIGN * ROW_ALIGN))
    t_rows = int(t_rows)

    g = -(-HW // 128)                       # 128-lane pixel row-groups
    ncores = _num_tensorcores()
    num_shards = ncores if (ncores > 1 and g >= 2 * ncores * ROW_ALIGN) else 1

    rows_per_shard = -(-g // num_shards)
    t_rows = min(t_rows, -(-rows_per_shard // ROW_ALIGN) * ROW_ALIGN)
    t_rows = max(ROW_ALIGN, t_rows // ROW_ALIGN * ROW_ALIGN)

    chunk = num_shards * t_rows
    g_pad = -(-g // chunk) * chunk
    inner = g_pad // chunk                  # pixel-reduction tiles per shard

    x = inputs.reshape(N, C, HW)            # native dtype stays in HBM
    t = targets.reshape(N, HW).astype(t_dtype)

    pad_px = g_pad * 128 - HW
    pad_c = c_pad - C
    if pad_px or pad_c:
        x = jnp.pad(x, ((0, 0), (0, pad_c), (0, pad_px)))
    if pad_px:
        t = jnp.pad(t, ((0, 0), (0, pad_px)), constant_values=IGNORE_INDEX)
    x = x.reshape(N, c_pad, g_pad, 128)
    t = t.reshape(N, g_pad, 128)

    kernel = _make_ce2d_kernel(c_tile, c_pad)

    partials = pl.pallas_call(
        kernel,
        out_shape=jax.ShapeDtypeStruct((num_shards, 2, t_rows, 128), jnp.float32),
        grid_spec=pltpu.PrefetchScalarGridSpec(
            num_scalar_prefetch=0,
            grid=(num_shards, inner, c_steps),
            in_specs=[
                pl.BlockSpec((N, c_tile, t_rows, 128),
                             lambda s, i, c: (0, c, s * inner + i, 0)),
                pl.BlockSpec((N, t_rows, 128),
                             lambda s, i, c: (0, s * inner + i, 0)),
            ],
            out_specs=pl.BlockSpec((1, 2, t_rows, 128),
                                   lambda s, i, c: (s, 0, 0, 0)),
        ),
        compiler_params=pltpu.CompilerParams(
            dimension_semantics=("parallel", "arbitrary", "arbitrary"),
            vmem_limit_bytes=int(vmem_limit),
        ),
    )(x, t)

    total = jnp.sum(partials[:, 0])
    count = jnp.sum(partials[:, 1])
    # NaN when every target == ignore_index, matching PyTorch's 'mean' reduction.
    return total / count


def _reference(inputs, targets):
    # Pure-JAX reference reproducing the PyTorch semantics (dim=0 log_softmax quirk).
    N, C, H, W = inputs.shape
    lp = jax.nn.log_softmax(inputs.astype(jnp.float32), axis=0)
    safe_t = jnp.clip(targets, 0, C - 1)
    gathered = jnp.take_along_axis(lp, safe_t[:, None, :, :], axis=1)[:, 0]
    valid = (targets != IGNORE_INDEX).astype(jnp.float32)
    return -(gathered * valid).sum() / valid.sum()


if __name__ == "__main__":
    # Test 1: base demo shape (f32).
    k_x, k_t = jax.random.split(jax.random.PRNGKey(0))
    N, C, H, W = 2, 4, 16, 16
    inputs = jax.random.normal(k_x, (N, C, H, W), dtype=jnp.float32)
    targets = jax.random.randint(k_t, (N, H, W), 0, C, dtype=jnp.int32)
    targets = targets.at[0, :2, :].set(IGNORE_INDEX)   # exercise the ignore path
    loss = cross_entropy_loss_2d(inputs, targets)
    jax.block_until_ready(loss)
    ref = _reference(inputs, targets)
    assert jnp.allclose(loss, ref, atol=1e-5, rtol=1e-5), (loss, ref)

    # Test 2: multiple pixel tiles + multiple class tiles (with class padding), f32.
    k_x2, k_t2 = jax.random.split(jax.random.PRNGKey(1))
    N2, C2, H2, W2 = 2, 7, 72, 72
    inputs2 = jax.random.normal(k_x2, (N2, C2, H2, W2), dtype=jnp.float32)
    targets2 = jax.random.randint(k_t2, (N2, H2, W2), 0, C2, dtype=jnp.int32)
    targets2 = targets2.at[1, 5:9, :].set(IGNORE_INDEX)
    loss2 = cross_entropy_loss_2d(inputs2, targets2, c_tile=3, t_rows=32)
    jax.block_until_ready(loss2)
    ref2 = _reference(inputs2, targets2)
    assert jnp.allclose(loss2, ref2, atol=1e-4, rtol=1e-4), (loss2, ref2)

    # Test 3: bf16 inputs exercise the packed-dtype (16,128) block path.
    inputs3 = inputs2.astype(jnp.bfloat16)
    loss3 = cross_entropy_loss_2d(inputs3, targets2)
    jax.block_until_ready(loss3)
    ref3 = _reference(inputs3, targets2)
    assert jnp.allclose(loss3, ref3, atol=1e-4, rtol=1e-4), (loss3, ref3)

    print("KERNEL_OK")
</pallas_src>

<mosaic_0001>
module attributes {stable_mosaic.version = 11 : i64} {
  func.func @kernel(%arg0: i32, %arg1: i32, %arg2: i32, %arg3: memref<2x4x32x128xf32, #tpu.memory_space<vmem>>, %arg4: memref<2x32x128xi8, #tpu.memory_space<vmem>>, %arg5: memref<1x2x32x128xf32, #tpu.memory_space<vmem>>) attributes {dimension_semantics = [#tpu.dimension_semantics<parallel>, #tpu.dimension_semantics<arbitrary>, #tpu.dimension_semantics<arbitrary>], iteration_bounds = array<i64: 1, 1, 1>, scalar_prefetch = 0 : i64, scratch_operands = 0 : i64, tpu.core_type = #tpu.core_type<tc>, window_params = [{transform_indices = @transform_0, window_bounds = array<i64: 2, 4, 32, 128>}, {transform_indices = @transform_1, window_bounds = array<i64: 2, 32, 128>}, {transform_indices = @transform_2, window_bounds = array<i64: 1, 2, 32, 128>}]} {
    %c0_i32 = arith.constant 0 : i32
    %0 = arith.cmpi eq, %arg1, %c0_i32 : i32
    %c0_i32_0 = arith.constant 0 : i32
    %1 = arith.cmpi eq, %arg2, %c0_i32_0 : i32
    %2 = arith.andi %0, %1 : i1
    %3 = arith.extui %2 : i1 to i32
    %c0_i32_1 = arith.constant 0 : i32
    %4 = arith.cmpi ne, %3, %c0_i32_1 : i32
    scf.if %4 {
      %cst_44 = arith.constant 0.000000e+00 : f32
      %98 = vector.broadcast %cst_44 : f32 to vector<1x2x32x128xf32>
      %c0_45 = arith.constant 0 : index
      %c0_46 = arith.constant 0 : index
      %c0_47 = arith.constant 0 : index
      %c0_48 = arith.constant 0 : index
      %99 = vector.load %arg5[%c0_45, %c0_46, %c0_47, %c0_48] : memref<1x2x32x128xf32, #tpu.memory_space<vmem>>, vector<1x2x32x128xf32>
      tpu.vector_store %arg5[%c0_45, %c0_46, %c0_47, %c0_48], %98 {strides = array<i32>} : memref<1x2x32x128xf32, #tpu.memory_space<vmem>>, vector<1x2x32x128xf32>,
    } else {
    }
    %c0 = arith.constant 0 : index
    %c0_2 = arith.constant 0 : index
    %c0_3 = arith.constant 0 : index
    %5 = vector.load %arg4[%c0, %c0_2, %c0_3] : memref<2x32x128xi8, #tpu.memory_space<vmem>>, vector<2x32x128xi8>
    %6 = arith.extui %5 : vector<2x32x128xi8> to vector<2x32x128xi32>
    %c4_i32 = arith.constant 4 : i32
    %7 = arith.muli %arg2, %c4_i32 : i32
    %cst = arith.constant 0.000000e+00 : f32
    %8 = vector.broadcast %cst : f32 to vector<32x128xf32>
    %c0_4 = arith.constant 0 : index
    %c0_5 = arith.constant 0 : index
    %c0_6 = arith.constant 0 : index
    %c0_7 = arith.constant 0 : index
    %9 = vector.load %arg3[%c0_4, %c0_5, %c0_6, %c0_7] : memref<2x4x32x128xf32, #tpu.memory_space<vmem>>, vector<2x1x32x128xf32>
    %10 = vector.shape_cast %9 : vector<2x1x32x128xf32> to vector<2x32x128xf32>
    %cst_8 = arith.constant dense<0xFF800000> : vector<32x128xf32>
    %11 = vector.multi_reduction <maximumf>, %10, %cst_8 [0] : vector<2x32x128xf32> to vector<32x128xf32>
    %12 = vector.shape_cast %11 : vector<32x128xf32> to vector<1x32x128xf32>
    %13 = vector.broadcast %12 : vector<1x32x128xf32> to vector<2x32x128xf32>
    %14 = arith.subf %10, %13 : vector<2x32x128xf32>
    %15 = math.exp %14 : vector<2x32x128xf32>
    %cst_9 = arith.constant dense<0.000000e+00> : vector<32x128xf32>
    %16 = vector.multi_reduction <add>, %15, %cst_9 [0] : vector<2x32x128xf32> to vector<32x128xf32>
    %17 = vector.shape_cast %16 : vector<32x128xf32> to vector<1x32x128xf32>
    %18 = math.log %17 : vector<1x32x128xf32>
    %19 = arith.addf %12, %18 : vector<1x32x128xf32>
    %c0_i32_10 = arith.constant 0 : i32
    %20 = arith.addi %7, %c0_i32_10 : i32
    %21 = vector.broadcast %20 : i32 to vector<2x32x128xi32>
    %22 = arith.cmpi eq, %6, %21 : vector<2x32x128xi32>
    %23 = vector.broadcast %19 : vector<1x32x128xf32> to vector<2x32x128xf32>
    %24 = arith.subf %23, %10 : vector<2x32x128xf32>
    %cst_11 = arith.constant 0.000000e+00 : f32
    %25 = vector.broadcast %cst_11 : f32 to vector<2x32x128xf32>
    %26 = arith.select %22, %24, %25 : vector<2x32x128xi1>, vector<2x32x128xf32>
    %cst_12 = arith.constant dense<0.000000e+00> : vector<32x128xf32>
    %27 = vector.multi_reduction <add>, %26, %cst_12 [0] : vector<2x32x128xf32> to vector<32x128xf32>
    %28 = arith.addf %8, %27 : vector<32x128xf32>
    %c0_13 = arith.constant 0 : index
    %c1 = arith.constant 1 : index
    %c0_14 = arith.constant 0 : index
    %c0_15 = arith.constant 0 : index
    %29 = vector.load %arg3[%c0_13, %c1, %c0_14, %c0_15] : memref<2x4x32x128xf32, #tpu.memory_space<vmem>>, vector<2x1x32x128xf32>
    %30 = vector.shape_cast %29 : vector<2x1x32x128xf32> to vector<2x32x128xf32>
    %cst_16 = arith.constant dense<0xFF800000> : vector<32x128xf32>
    %31 = vector.multi_reduction <maximumf>, %30, %cst_16 [0] : vector<2x32x128xf32> to vector<32x128xf32>
    %32 = vector.shape_cast %31 : vector<32x128xf32> to vector<1x32x128xf32>
    %33 = vector.broadcast %32 : vector<1x32x128xf32> to vector<2x32x128xf32>
    %34 = arith.subf %30, %33 : vector<2x32x128xf32>
    %35 = math.exp %34 : vector<2x32x128xf32>
    %cst_17 = arith.constant dense<0.000000e+00> : vector<32x128xf32>
    %36 = vector.multi_reduction <add>, %35, %cst_17 [0] : vector<2x32x128xf32> to vector<32x128xf32>
    %37 = vector.shape_cast %36 : vector<32x128xf32> to vector<1x32x128xf32>
    %38 = math.log %37 : vector<1x32x128xf32>
    %39 = arith.addf %32, %38 : vector<1x32x128xf32>
    %c1_i32 = arith.constant 1 : i32
    %40 = arith.addi %7, %c1_i32 : i32
    %41 = vector.broadcast %40 : i32 to vector<2x32x128xi32>
    %42 = arith.cmpi eq, %6, %41 : vector<2x32x128xi32>
    %43 = vector.broadcast %39 : vector<1x32x128xf32> to vector<2x32x128xf32>
    %44 = arith.subf %43, %30 : vector<2x32x128xf32>
    %cst_18 = arith.constant 0.000000e+00 : f32
    %45 = vector.broadcast %cst_18 : f32 to vector<2x32x128xf32>
    %46 = arith.select %42, %44, %45 : vector<2x32x128xi1>, vector<2x32x128xf32>
    %cst_19 = arith.constant dense<0.000000e+00> : vector<32x128xf32>
    %47 = vector.multi_reduction <add>, %46, %cst_19 [0] : vector<2x32x128xf32> to vector<32x128xf32>
    %48 = arith.addf %28, %47 : vector<32x128xf32>
    %c0_20 = arith.constant 0 : index
    %c2 = arith.constant 2 : index
    %c0_21 = arith.constant 0 : index
    %c0_22 = arith.constant 0 : index
    %49 = vector.load %arg3[%c0_20, %c2, %c0_21, %c0_22] : memref<2x4x32x128xf32, #tpu.memory_space<vmem>>, vector<2x1x32x128xf32>
    %50 = vector.shape_cast %49 : vector<2x1x32x128xf32> to vector<2x32x128xf32>
    %cst_23 = arith.constant dense<0xFF800000> : vector<32x128xf32>
    %51 = vector.multi_reduction <maximumf>, %50, %cst_23 [0] : vector<2x32x128xf32> to vector<32x128xf32>
    %52 = vector.shape_cast %51 : vector<32x128xf32> to vector<1x32x128xf32>
    %53 = vector.broadcast %52 : vector<1x32x128xf32> to vector<2x32x128xf32>
    %54 = arith.subf %50, %53 : vector<2x32x128xf32>
    %55 = math.exp %54 : vector<2x32x128xf32>
    %cst_24 = arith.constant dense<0.000000e+00> : vector<32x128xf32>
    %56 = vector.multi_reduction <add>, %55, %cst_24 [0] : vector<2x32x128xf32> to vector<32x128xf32>
    %57 = vector.shape_cast %56 : vector<32x128xf32> to vector<1x32x128xf32>
    %58 = math.log %57 : vector<1x32x128xf32>
    %59 = arith.addf %52, %58 : vector<1x32x128xf32>
    %c2_i32 = arith.constant 2 : i32
    %60 = arith.addi %7, %c2_i32 : i32
    %61 = vector.broadcast %60 : i32 to vector<2x32x128xi32>
    %62 = arith.cmpi eq, %6, %61 : vector<2x32x128xi32>
    %63 = vector.broadcast %59 : vector<1x32x128xf32> to vector<2x32x128xf32>
    %64 = arith.subf %63, %50 : vector<2x32x128xf32>
    %cst_25 = arith.constant 0.000000e+00 : f32
    %65 = vector.broadcast %cst_25 : f32 to vector<2x32x128xf32>
    %66 = arith.select %62, %64, %65 : vector<2x32x128xi1>, vector<2x32x128xf32>
    %cst_26 = arith.constant dense<0.000000e+00> : vector<32x128xf32>
    %67 = vector.multi_reduction <add>, %66, %cst_26 [0] : vector<2x32x128xf32> to vector<32x128xf32>
    %68 = arith.addf %48, %67 : vector<32x128xf32>
    %c0_27 = arith.constant 0 : index
    %c3 = arith.constant 3 : index
    %c0_28 = arith.constant 0 : index
    %c0_29 = arith.constant 0 : index
    %69 = vector.load %arg3[%c0_27, %c3, %c0_28, %c0_29] : memref<2x4x32x128xf32, #tpu.memory_space<vmem>>, vector<2x1x32x128xf32>
    %70 = vector.shape_cast %69 : vector<2x1x32x128xf32> to vector<2x32x128xf32>
    %cst_30 = arith.constant dense<0xFF800000> : vector<32x128xf32>
    %71 = vector.multi_reduction <maximumf>, %70, %cst_30 [0] : vector<2x32x128xf32> to vector<32x128xf32>
    %72 = vector.shape_cast %71 : vector<32x128xf32> to vector<1x32x128xf32>
    %73 = vector.broadcast %72 : vector<1x32x128xf32> to vector<2x32x128xf32>
    %74 = arith.subf %70, %73 : vector<2x32x128xf32>
    %75 = math.exp %74 : vector<2x32x128xf32>
    %cst_31 = arith.constant dense<0.000000e+00> : vector<32x128xf32>
    %76 = vector.multi_reduction <add>, %75, %cst_31 [0] : vector<2x32x128xf32> to vector<32x128xf32>
    %77 = vector.shape_cast %76 : vector<32x128xf32> to vector<1x32x128xf32>
    %78 = math.log %77 : vector<1x32x128xf32>
    %79 = arith.addf %72, %78 : vector<1x32x128xf32>
    %c3_i32 = arith.constant 3 : i32
    %80 = arith.addi %7, %c3_i32 : i32
    %81 = vector.broadcast %80 : i32 to vector<2x32x128xi32>
    %82 = arith.cmpi eq, %6, %81 : vector<2x32x128xi32>
    %83 = vector.broadcast %79 : vector<1x32x128xf32> to vector<2x32x128xf32>
    %84 = arith.subf %83, %70 : vector<2x32x128xf32>
    %cst_32 = arith.constant 0.000000e+00 : f32
    %85 = vector.broadcast %cst_32 : f32 to vector<2x32x128xf32>
    %86 = arith.select %82, %84, %85 : vector<2x32x128xi1>, vector<2x32x128xf32>
    %cst_33 = arith.constant dense<0.000000e+00> : vector<32x128xf32>
    %87 = vector.multi_reduction <add>, %86, %cst_33 [0] : vector<2x32x128xf32> to vector<32x128xf32>
    %88 = arith.addf %68, %87 : vector<32x128xf32>
    %c0_34 = arith.constant 0 : index
    %c0_35 = arith.constant 0 : index
    %c0_36 = arith.constant 0 : index
    %c0_37 = arith.constant 0 : index
    %89 = vector.load %arg5[%c0_34, %c0_35, %c0_36, %c0_37] : memref<1x2x32x128xf32, #tpu.memory_space<vmem>>, vector<1x1x32x128xf32>
    %90 = vector.shape_cast %89 : vector<1x1x32x128xf32> to vector<32x128xf32>
    %91 = arith.addf %90, %88 : vector<32x128xf32>
    %c0_38 = arith.constant 0 : index
    %c0_39 = arith.constant 0 : index
    %c0_40 = arith.constant 0 : index
    %c0_41 = arith.constant 0 : index
    %92 = vector.load %arg5[%c0_38, %c0_39, %c0_40, %c0_41] : memref<1x2x32x128xf32, #tpu.memory_space<vmem>>, vector<1x1x32x128xf32>
    %93 = vector.shape_cast %92 : vector<1x1x32x128xf32> to vector<32x128xf32>
    %94 = vector.shape_cast %91 : vector<32x128xf32> to vector<1x1x32x128xf32>
    tpu.vector_store %arg5[%c0_38, %c0_39, %c0_40, %c0_41], %94 {strides = array<i32>} : memref<1x2x32x128xf32, #tpu.memory_space<vmem>>, vector<1x1x32x128xf32>,
    %c0_i32_42 = arith.constant 0 : i32
    %95 = arith.cmpi eq, %arg2, %c0_i32_42 : i32
    %96 = arith.extui %95 : i1 to i32
    %c0_i32_43 = arith.constant 0 : i32
    %97 = arith.cmpi ne, %96, %c0_i32_43 : i32
    scf.if %97 {
      %c255_i32 = arith.constant 255 : i32
      %98 = vector.broadcast %c255_i32 : i32 to vector<2x32x128xi32>
      %99 = arith.cmpi ne, %6, %98 : vector<2x32x128xi32>
      %c0_44 = arith.constant 0 : index
      %c1_45 = arith.constant 1 : index
      %c0_46 = arith.constant 0 : index
      %c0_47 = arith.constant 0 : index
      %100 = vector.load %arg5[%c0_44, %c1_45, %c0_46, %c0_47] : memref<1x2x32x128xf32, #tpu.memory_space<vmem>>, vector<1x1x32x128xf32>
      %101 = vector.shape_cast %100 : vector<1x1x32x128xf32> to vector<32x128xf32>
      %102 = arith.extui %99 : vector<2x32x128xi1> to vector<2x32x128xi32>
      %103 = arith.sitofp %102 : vector<2x32x128xi32> to vector<2x32x128xf32>
      %cst_48 = arith.constant dense<0.000000e+00> : vector<32x128xf32>
      %104 = vector.multi_reduction <add>, %103, %cst_48 [0] : vector<2x32x128xf32> to vector<32x128xf32>
      %105 = arith.addf %101, %104 : vector<32x128xf32>
      %c0_49 = arith.constant 0 : index
      %c1_50 = arith.constant 1 : index
      %c0_51 = arith.constant 0 : index
      %c0_52 = arith.constant 0 : index
      %106 = vector.load %arg5[%c0_49, %c1_50, %c0_51, %c0_52] : memref<1x2x32x128xf32, #tpu.memory_space<vmem>>, vector<1x1x32x128xf32>
      %107 = vector.shape_cast %106 : vector<1x1x32x128xf32> to vector<32x128xf32>
      %108 = vector.shape_cast %105 : vector<32x128xf32> to vector<1x1x32x128xf32>
      tpu.vector_store %arg5[%c0_49, %c1_50, %c0_51, %c0_52], %108 {strides = array<i32>} : memref<1x2x32x128xf32, #tpu.memory_space<vmem>>, vector<1x1x32x128xf32>,
    } else {
    }
    return
  }
  func.func @transform_0(%arg0: i32, %arg1: i32, %arg2: i32) -> (i32, i32, i32, i32) {
    %c1_i32 = arith.constant 1 : i32
    %0 = arith.muli %arg0, %c1_i32 : i32
    %1 = arith.addi %0, %arg1 : i32
    %c0_i32 = arith.constant 0 : i32
    %c0_i32_0 = arith.constant 0 : i32
    %c0_i32_1 = arith.constant 0 : i32
    return %c0_i32, %arg2, %1, %c0_i32_0 : i32, i32, i32, i32
  }
  func.func @transform_1(%arg0: i32, %arg1: i32, %arg2: i32) -> (i32, i32, i32) {
    %c1_i32 = arith.constant 1 : i32
    %0 = arith.muli %arg0, %c1_i32 : i32
    %1 = arith.addi %0, %arg1 : i32
    %c0_i32 = arith.constant 0 : i32
    %c0_i32_0 = arith.constant 0 : i32
    %c0_i32_1 = arith.constant 0 : i32
    return %c0_i32, %1, %c0_i32_0 : i32, i32, i32
  }
  func.func @transform_2(%arg0: i32, %arg1: i32, %arg2: i32) -> (i32, i32, i32, i32) {
    %c0_i32 = arith.constant 0 : i32
    %c0_i32_0 = arith.constant 0 : i32
    %c0_i32_1 = arith.constant 0 : i32
    %c0_i32_2 = arith.constant 0 : i32
    return %arg0, %c0_i32, %c0_i32_0, %c0_i32_1 : i32, i32, i32, i32
  }
}

</mosaic_0001>

<llo_original>
// kernel: tpu_custom_call.1
$region0: #{tpu_custom_call.1}
  #allocation0 [shape = 'u32[]', space=smem, size = 0x4, offset = 0x4, fixed_abs, tag = 'smem constant byte address 0x4 - core index']
  #allocation1 [shape = 'u32[72,128]{1,0:T(1,128)}', space=vmem, size = 0x9000, scoped, tag = 'internal scratch']
  %s0 = inlined_call_operand.hbm [shape: f32[2,4,32,128], index: 0, kind: input, shape index: {}]
  %s1 = inlined_call_operand.hbm [shape: u8[2,32,128], index: 1, kind: input, shape index: {}]
  %s2 = inlined_call_operand.hbm [shape: f32[1,2,32,128], index: 2, kind: output, shape index: {}]
  %s3 = sld [smem:[#allocation0]]
  $region34: #{tpu_custom_call.1} parent=0
    _
  %s5 = ssub.s32 1, %s3
  %s6 = scalar_select 0, %s5, %s3
  $region1: #{tpu_custom_call.1} parent=0
    #allocation2 [shape = 'u8[131072]{0}', space=vmem, size = 0x20000, scoped, tag = 'input window, operand 0, single buffered']
    #allocation3 [shape = 's32[1]{0}', space=sflag, size = 0x4, scoped, tag = 'scoped memory for tpu_custom_call.1']
    #allocation4 [shape = 's32[1]{0}', space=sflag, size = 0x4, scoped, tag = 'scoped memory for tpu_custom_call.1']
    #allocation5 [shape = 'u8[8192]{0}', space=vmem, size = 0x2000, scoped, tag = 'input window, operand 1, single buffered']
    #allocation6 [shape = 's32[1]{0}', space=sflag, size = 0x4, scoped, tag = 'scoped memory for tpu_custom_call.1']
    #allocation7 [shape = 'u8[32768]{0}', space=vmem, size = 0x8000, scoped, tag = 'output window, operand 0, single buffered']
    %7 = vsyncpa [#allocation3], 0
    %8 = vsyncpa [#allocation6], 0
    %9 = vsyncpa [#allocation4], 0
    // Predicated region
    $region2: #{tpu_custom_call.1} parent=1 // pred_check
      _
    $region3: #{tpu_custom_call.1} parent=1 // pred_check_branch
      %11 = sbr.rel (0) target = $region5
    $region4: #{tpu_custom_call.1} parent=1 // pred_region
      %s12 = sadd.s32 0, 0
      %s13 = smul.u32 4, %s12
      %15 = vsyncadd [#allocation3], 0
      %s16 = smul.addr %s13, 8
      %s17 = scalar_lea.hbm %s0, %s16
      %s18 = sshll.u32 %s17, 4
      %s19 = int_to_ptr.hbm [resolvable:$true] %s18
      %s20 = sshll.u32 [#allocation2], 4
      %s21 = int_to_ptr.vmem [resolvable:$true] %s20
      %26 = dma.hbm_to_vmem [thread:$0]  %s19, 4096, %s21, [#allocation3], 128, 128, 8
    $region5: #{tpu_custom_call.1} parent=1 // pred_fallthru
      _
    // Predicated region
    $region6: #{tpu_custom_call.1} parent=1 // pred_check
      _
    $region7: #{tpu_custom_call.1} parent=1 // pred_check_branch
      %28 = sbr.rel (0) target = $region9
    $region8: #{tpu_custom_call.1} parent=1 // pred_region
      %s29 = sadd.s32 0, 0
      %31 = vsyncadd [#allocation6], 0
      %s32 = smul.addr %s29, 8
      %s33 = scalar_lea.hbm %s1, %s32
      %s34 = sshll.u32 %s33, 4
      %s35 = int_to_ptr.hbm [resolvable:$true] %s34
      %s36 = sshll.u32 [#allocation5], 4
      %s37 = int_to_ptr.vmem [resolvable:$true] %s36
      %42 = dma.hbm_to_vmem [thread:$0]  %s35, 256, %s37, [#allocation6], 128, 128, 8
    $region9: #{tpu_custom_call.1} parent=1 // pred_fallthru
      _
    // Predicated region
    $region10: #{tpu_custom_call.1} parent=1 // pred_check
      _
    $region11: #{tpu_custom_call.1} parent=1 // pred_check_branch
      %44 = sbr.rel (0) target = $region13
    $region12: #{tpu_custom_call.1} parent=1 // pred_region
      %46 = dma.done [#allocation3], 4096
    $region13: #{tpu_custom_call.1} parent=1 // pred_fallthru
      _
    // Predicated region
    $region14: #{tpu_custom_call.1} parent=1 // pred_check
      _
    $region15: #{tpu_custom_call.1} parent=1 // pred_check_branch
      %48 = sbr.rel (0) target = $region17
    $region16: #{tpu_custom_call.1} parent=1 // pred_region
      %50 = dma.done [#allocation6], 256
    $region17: #{tpu_custom_call.1} parent=1 // pred_fallthru
      _
    %s51 = sadd.s32 0, 0
    %s52 = smul.u32 4, %s51
    %s53 = sadd.s32 0, 0
    %p54 = scmp.eq.s32.totalorder 0, 0
    %p55 = scmp.eq.s32.totalorder 0, 0
    %p56 = pnand %p54, %p55
    %p57 = pneg %p56
    // Predicated region
    $region18: #{tpu_custom_call.1} parent=1 // pred_check
      _
    $region19: #{tpu_custom_call.1} parent=1 // pred_check_branch
      %59 = sbr.rel (%p56) target = $region21
    $region20: #{tpu_custom_call.1} parent=1 // pred_region
      %60 = vst [vmem:[#allocation7] sm:$0xff] 0.0
      %61 = vst [vmem:[#allocation7 + $0x8] sm:$0xff] 0.0
      %62 = vst [vmem:[#allocation7 + $0x10] sm:$0xff] 0.0
      %63 = vst [vmem:[#allocation7 + $0x18] sm:$0xff] 0.0
      %64 = vst [vmem:[#allocation7 + $0x20] sm:$0xff] 0.0
      %65 = vst [vmem:[#allocation7 + $0x28] sm:$0xff] 0.0
      %66 = vst [vmem:[#allocation7 + $0x30] sm:$0xff] 0.0
      %67 = vst [vmem:[#allocation7 + $0x38] sm:$0xff] 0.0
    $region21: #{tpu_custom_call.1} parent=1 // pred_fallthru
      _
    %v68 = vld [vmem:[#allocation5] sm:$0xff]
    %v69 = vld [vmem:[#allocation5 + $0x8] sm:$0xff]
    %v70 = vunpack.c.0.s8 %v68
    %v71 = vunpack.c.1.s8 %v68
    %v72 = vunpack.c.2.s8 %v68
    %v73 = vunpack.c.3.s8 %v68
    %v74 = vunpack.c.0.s8 %v69
    %v75 = vunpack.c.1.s8 %v69
    %v76 = vunpack.c.2.s8 %v69
    %v77 = vunpack.c.3.s8 %v69
    %v78 = vand.u32 %v70, 255
    %v79 = vand.u32 %v71, 255
    %v80 = vand.u32 %v72, 255
    %v81 = vand.u32 %v73, 255
    %v82 = vand.u32 %v74, 255
    %v83 = vand.u32 %v75, 255
    %v84 = vand.u32 %v76, 255
    %v85 = vand.u32 %v77, 255
    %s86 = smul.u32 0, 4
    %v87 = vld [vmem:[#allocation2] sm:$0xff]
    %v88 = vld [vmem:[#allocation2 + $0x8] sm:$0xff]
    %v89 = vld [vmem:[#allocation2 + $0x10] sm:$0xff]
    %v90 = vld [vmem:[#allocation2 + $0x18] sm:$0xff]
    %v91 = vld [vmem:[#allocation2 + $0x80] sm:$0xff]
    %v92 = vld [vmem:[#allocation2 + $0x88] sm:$0xff]
    %v93 = vld [vmem:[#allocation2 + $0x90] sm:$0xff]
    %v94 = vld [vmem:[#allocation2 + $0x98] sm:$0xff]
    %v95 = vmax.f32 %v87, %v91
    %v96 = vmax.f32 %v88, %v92
    %v97 = vmax.f32 %v89, %v93
    %v98 = vmax.f32 %v90, %v94
    %v99 = vsub.f32 %v87, %v95
    %v100 = vsub.f32 %v88, %v96
    %v101 = vsub.f32 %v89, %v97
    %v102 = vsub.f32 %v90, %v98
    %v103 = vsub.f32 %v91, %v95
    %v104 = vsub.f32 %v92, %v96
    %v105 = vsub.f32 %v93, %v97
    %v106 = vsub.f32 %v94, %v98
    %v107 = vmul.f32 %v99, 1.442695
    %v108 = vpow.pop %v107
    %v109 = vmul.f32 %v100, 1.442695
    %v110 = vpow.pop %v109
    %v111 = vmul.f32 %v101, 1.442695
    %v112 = vpow.pop %v111
    %v113 = vmul.f32 %v102, 1.442695
    %v114 = vpow.pop %v113
    %v115 = vmul.f32 %v103, 1.442695
    %v116 = vpow.pop %v115
    %v117 = vmul.f32 %v104, 1.442695
    %v118 = vpow.pop %v117
    %v119 = vmul.f32 %v105, 1.442695
    %v120 = vpow.pop %v119
    %v121 = vmul.f32 %v106, 1.442695
    %v122 = vpow.pop %v121
    %v123 = vadd.f32 %v108, %v116
    %v124 = vadd.f32 %v110, %v118
    %v125 = vadd.f32 %v112, %v120
    %v126 = vadd.f32 %v114, %v122
    %v127 = vlog2.pop %v123
    %v128 = vmul.f32 %v127, 0.6931472
    %v129 = vlog2.pop %v124
    %v130 = vmul.f32 %v129, 0.6931472
    %v131 = vlog2.pop %v125
    %v132 = vmul.f32 %v131, 0.6931472
    %v133 = vlog2.pop %v126
    %v134 = vmul.f32 %v133, 0.6931472
    %v135 = vadd.f32 %v95, %v128
    %v136 = vadd.f32 %v96, %v130
    %v137 = vadd.f32 %v97, %v132
    %v138 = vadd.f32 %v98, %v134
    %v139 = vstv %s86
    %vm140 = vcmp.eq.s32.totalorder %v78, %v139
    %vm141 = vcmp.eq.s32.totalorder %v79, %v139
    %vm142 = vcmp.eq.s32.totalorder %v80, %v139
    %vm143 = vcmp.eq.s32.totalorder %v81, %v139
    %vm144 = vcmp.eq.s32.totalorder %v82, %v139
    %vm145 = vcmp.eq.s32.totalorder %v83, %v139
    %vm146 = vcmp.eq.s32.totalorder %v84, %v139
    %vm147 = vcmp.eq.s32.totalorder %v85, %v139
    %v148 = vsub.f32 %v135, %v87
    %v149 = vsub.f32 %v136, %v88
    %v150 = vsub.f32 %v137, %v89
    %v151 = vsub.f32 %v138, %v90
    %v152 = vsub.f32 %v135, %v91
    %v153 = vsub.f32 %v136, %v92
    %v154 = vsub.f32 %v137, %v93
    %v155 = vsub.f32 %v138, %v94
    %v156 = vsel %vm140, %v148, 0.0
    %v157 = vsel %vm141, %v149, 0.0
    %v158 = vsel %vm142, %v150, 0.0
    %v159 = vsel %vm143, %v151, 0.0
    %v160 = vsel %vm144, %v152, 0.0
    %v161 = vsel %vm145, %v153, 0.0
    %v162 = vsel %vm146, %v154, 0.0
    %v163 = vsel %vm147, %v155, 0.0
    %v164 = vadd.f32 %v156, %v160
    %v165 = vadd.f32 %v157, %v161
    %v166 = vadd.f32 %v158, %v162
    %v167 = vadd.f32 %v159, %v163
    %v168 = vadd.f32 %v164, 0.0
    %v169 = vadd.f32 %v165, 0.0
    %v170 = vadd.f32 %v166, 0.0
    %v171 = vadd.f32 %v167, 0.0
    %s172 = scalar_lea.vmem [#allocation2], 32
    %v173 = vld [vmem:[%s172] sm:$0xff]
    %v174 = vld [vmem:[%s172 + $0x8] sm:$0xff]
    %v175 = vld [vmem:[%s172 + $0x10] sm:$0xff]
    %v176 = vld [vmem:[%s172 + $0x18] sm:$0xff]
    %v177 = vld [vmem:[%s172 + $0x80] sm:$0xff]
    %v178 = vld [vmem:[%s172 + $0x88] sm:$0xff]
    %v179 = vld [vmem:[%s172 + $0x90] sm:$0xff]
    %v180 = vld [vmem:[%s172 + $0x98] sm:$0xff]
    %v181 = vmax.f32 %v173, %v177
    %v182 = vmax.f32 %v174, %v178
    %v183 = vmax.f32 %v175, %v179
    %v184 = vmax.f32 %v176, %v180
    %v185 = vsub.f32 %v173, %v181
    %v186 = vsub.f32 %v174, %v182
    %v187 = vsub.f32 %v175, %v183
    %v188 = vsub.f32 %v176, %v184
    %v189 = vsub.f32 %v177, %v181
    %v190 = vsub.f32 %v178, %v182
    %v191 = vsub.f32 %v179, %v183
    %v192 = vsub.f32 %v180, %v184
    %v193 = vmul.f32 %v185, 1.442695
    %v194 = vpow.pop %v193
    %v195 = vmul.f32 %v186, 1.442695
    %v196 = vpow.pop %v195
    %v197 = vmul.f32 %v187, 1.442695
    %v198 = vpow.pop %v197
    %v199 = vmul.f32 %v188, 1.442695
    %v200 = vpow.pop %v199
    %v201 = vmul.f32 %v189, 1.442695
    %v202 = vpow.pop %v201
    %v203 = vmul.f32 %v190, 1.442695
    %v204 = vpow.pop %v203
    %v205 = vmul.f32 %v191, 1.442695
    %v206 = vpow.pop %v205
    %v207 = vmul.f32 %v192, 1.442695
    %v208 = vpow.pop %v207
    %v209 = vadd.f32 %v194, %v202
    %v210 = vadd.f32 %v196, %v204
    %v211 = vadd.f32 %v198, %v206
    %v212 = vadd.f32 %v200, %v208
    %v213 = vlog2.pop %v209
    %v214 = vmul.f32 %v213, 0.6931472
    %v215 = vlog2.pop %v210
    %v216 = vmul.f32 %v215, 0.6931472
    %v217 = vlog2.pop %v211
    %v218 = vmul.f32 %v217, 0.6931472
    %v219 = vlog2.pop %v212
    %v220 = vmul.f32 %v219, 0.6931472
    %v221 = vadd.f32 %v181, %v214
    %v222 = vadd.f32 %v182, %v216
    %v223 = vadd.f32 %v183, %v218
    %v224 = vadd.f32 %v184, %v220
    %s225 = sadd.s32 %s86, 1
    %v226 = vstv %s225
    %vm227 = vcmp.eq.s32.totalorder %v78, %v226
    %vm228 = vcmp.eq.s32.totalorder %v79, %v226
    %vm229 = vcmp.eq.s32.totalorder %v80, %v226
    %vm230 = vcmp.eq.s32.totalorder %v81, %v226
    %vm231 = vcmp.eq.s32.totalorder %v82, %v226
    %vm232 = vcmp.eq.s32.totalorder %v83, %v226
    %vm233 = vcmp.eq.s32.totalorder %v84, %v226
    %vm234 = vcmp.eq.s32.totalorder %v85, %v226
    %v235 = vsub.f32 %v221, %v173
    %v236 = vsub.f32 %v222, %v174
    %v237 = vsub.f32 %v223, %v175
    %v238 = vsub.f32 %v224, %v176
    %v239 = vsub.f32 %v221, %v177
    %v240 = vsub.f32 %v222, %v178
    %v241 = vsub.f32 %v223, %v179
    %v242 = vsub.f32 %v224, %v180
    %v243 = vsel %vm227, %v235, 0.0
    %v244 = vsel %vm228, %v236, 0.0
    %v245 = vsel %vm229, %v237, 0.0
    %v246 = vsel %vm230, %v238, 0.0
    %v247 = vsel %vm231, %v239, 0.0
    %v248 = vsel %vm232, %v240, 0.0
    %v249 = vsel %vm233, %v241, 0.0
    %v250 = vsel %vm234, %v242, 0.0
    %v251 = vadd.f32 %v243, %v247
    %v252 = vadd.f32 %v244, %v248
    %v253 = vadd.f32 %v245, %v249
    %v254 = vadd.f32 %v246, %v250
    %v255 = vadd.f32 %v168, %v251
    %v256 = vadd.f32 %v169, %v252
    %v257 = vadd.f32 %v170, %v253
    %v258 = vadd.f32 %v171, %v254
    %s259 = scalar_lea.vmem [#allocation2], 64
    %v260 = vld [vmem:[%s259] sm:$0xff]
    %v261 = vld [vmem:[%s259 + $0x8] sm:$0xff]
    %v262 = vld [vmem:[%s259 + $0x10] sm:$0xff]
    %v263 = vld [vmem:[%s259 + $0x18] sm:$0xff]
    %v264 = vld [vmem:[%s259 + $0x80] sm:$0xff]
    %v265 = vld [vmem:[%s259 + $0x88] sm:$0xff]
    %v266 = vld [vmem:[%s259 + $0x90] sm:$0xff]
    %v267 = vld [vmem:[%s259 + $0x98] sm:$0xff]
    %v268 = vmax.f32 %v260, %v264
    %v269 = vmax.f32 %v261, %v265
    %v270 = vmax.f32 %v262, %v266
    %v271 = vmax.f32 %v263, %v267
    %v272 = vsub.f32 %v260, %v268
    %v273 = vsub.f32 %v261, %v269
    %v274 = vsub.f32 %v262, %v270
    %v275 = vsub.f32 %v263, %v271
    %v276 = vsub.f32 %v264, %v268
    %v277 = vsub.f32 %v265, %v269
    %v278 = vsub.f32 %v266, %v270
    %v279 = vsub.f32 %v267, %v271
    %v280 = vmul.f32 %v272, 1.442695
    %v281 = vpow.pop %v280
    %v282 = vmul.f32 %v273, 1.442695
    %v283 = vpow.pop %v282
    %v284 = vmul.f32 %v274, 1.442695
    %v285 = vpow.pop %v284
    %v286 = vmul.f32 %v275, 1.442695
    %v287 = vpow.pop %v286
    %v288 = vmul.f32 %v276, 1.442695
    %v289 = vpow.pop %v288
    %v290 = vmul.f32 %v277, 1.442695
    %v291 = vpow.pop %v290
    %v292 = vmul.f32 %v278, 1.442695
    %v293 = vpow.pop %v292
    %v294 = vmul.f32 %v279, 1.442695
    %v295 = vpow.pop %v294
    %v296 = vadd.f32 %v281, %v289
    %v297 = vadd.f32 %v283, %v291
    %v298 = vadd.f32 %v285, %v293
    %v299 = vadd.f32 %v287, %v295
    %v300 = vlog2.pop %v296
    %v301 = vmul.f32 %v300, 0.6931472
    %v302 = vlog2.pop %v297
    %v303 = vmul.f32 %v302, 0.6931472
    %v304 = vlog2.pop %v298
    %v305 = vmul.f32 %v304, 0.6931472
    %v306 = vlog2.pop %v299
    %v307 = vmul.f32 %v306, 0.6931472
    %v308 = vadd.f32 %v268, %v301
    %v309 = vadd.f32 %v269, %v303
    %v310 = vadd.f32 %v270, %v305
    %v311 = vadd.f32 %v271, %v307
    %s312 = sadd.s32 %s86, 2
    %v313 = vstv %s312
    %vm314 = vcmp.eq.s32.totalorder %v78, %v313
    %vm315 = vcmp.eq.s32.totalorder %v79, %v313
    %vm316 = vcmp.eq.s32.totalorder %v80, %v313
    %vm317 = vcmp.eq.s32.totalorder %v81, %v313
    %vm318 = vcmp.eq.s32.totalorder %v82, %v313
    %vm319 = vcmp.eq.s32.totalorder %v83, %v313
    %vm320 = vcmp.eq.s32.totalorder %v84, %v313
    %vm321 = vcmp.eq.s32.totalorder %v85, %v313
    %v322 = vsub.f32 %v308, %v260
    %v323 = vsub.f32 %v309, %v261
    %v324 = vsub.f32 %v310, %v262
    %v325 = vsub.f32 %v311, %v263
    %v326 = vsub.f32 %v308, %v264
    %v327 = vsub.f32 %v309, %v265
    %v328 = vsub.f32 %v310, %v266
    %v329 = vsub.f32 %v311, %v267
    %v330 = vsel %vm314, %v322, 0.0
    %v331 = vsel %vm315, %v323, 0.0
    %v332 = vsel %vm316, %v324, 0.0
    %v333 = vsel %vm317, %v325, 0.0
    %v334 = vsel %vm318, %v326, 0.0
    %v335 = vsel %vm319, %v327, 0.0
    %v336 = vsel %vm320, %v328, 0.0
    %v337 = vsel %vm321, %v329, 0.0
    %v338 = vadd.f32 %v330, %v334
    %v339 = vadd.f32 %v331, %v335
    %v340 = vadd.f32 %v332, %v336
    %v341 = vadd.f32 %v333, %v337
    %v342 = vadd.f32 %v255, %v338
    %v343 = vadd.f32 %v256, %v339
    %v344 = vadd.f32 %v257, %v340
    %v345 = vadd.f32 %v258, %v341
    %s346 = scalar_lea.vmem [#allocation2], 96
    %v347 = vld [vmem:[%s346] sm:$0xff]
    %v348 = vld [vmem:[%s346 + $0x8] sm:$0xff]
    %v349 = vld [vmem:[%s346 + $0x10] sm:$0xff]
    %v350 = vld [vmem:[%s346 + $0x18] sm:$0xff]
    %v351 = vld [vmem:[%s346 + $0x80] sm:$0xff]
    %v352 = vld [vmem:[%s346 + $0x88] sm:$0xff]
    %v353 = vld [vmem:[%s346 + $0x90] sm:$0xff]
    %v354 = vld [vmem:[%s346 + $0x98] sm:$0xff]
    %v355 = vmax.f32 %v347, %v351
    %v356 = vmax.f32 %v348, %v352
    %v357 = vmax.f32 %v349, %v353
    %v358 = vmax.f32 %v350, %v354
    %v359 = vsub.f32 %v347, %v355
    %v360 = vsub.f32 %v348, %v356
    %v361 = vsub.f32 %v349, %v357
    %v362 = vsub.f32 %v350, %v358
    %v363 = vsub.f32 %v351, %v355
    %v364 = vsub.f32 %v352, %v356
    %v365 = vsub.f32 %v353, %v357
    %v366 = vsub.f32 %v354, %v358
    %v367 = vmul.f32 %v359, 1.442695
    %v368 = vpow.pop %v367
    %v369 = vmul.f32 %v360, 1.442695
    %v370 = vpow.pop %v369
    %v371 = vmul.f32 %v361, 1.442695
    %v372 = vpow.pop %v371
    %v373 = vmul.f32 %v362, 1.442695
    %v374 = vpow.pop %v373
    %v375 = vmul.f32 %v363, 1.442695
    %v376 = vpow.pop %v375
    %v377 = vmul.f32 %v364, 1.442695
    %v378 = vpow.pop %v377
    %v379 = vmul.f32 %v365, 1.442695
    %v380 = vpow.pop %v379
    %v381 = vmul.f32 %v366, 1.442695
    %v382 = vpow.pop %v381
    %v383 = vadd.f32 %v368, %v376
    %v384 = vadd.f32 %v370, %v378
    %v385 = vadd.f32 %v372, %v380
    %v386 = vadd.f32 %v374, %v382
    %v387 = vlog2.pop %v383
    %v388 = vmul.f32 %v387, 0.6931472
    %v389 = vlog2.pop %v384
    %v390 = vmul.f32 %v389, 0.6931472
    %v391 = vlog2.pop %v385
    %v392 = vmul.f32 %v391, 0.6931472
    %v393 = vlog2.pop %v386
    %v394 = vmul.f32 %v393, 0.6931472
    %v395 = vadd.f32 %v355, %v388
    %v396 = vadd.f32 %v356, %v390
    %v397 = vadd.f32 %v357, %v392
    %v398 = vadd.f32 %v358, %v394
    %s399 = sadd.s32 %s86, 3
    %v400 = vstv %s399
    %vm401 = vcmp.eq.s32.totalorder %v78, %v400
    %vm402 = vcmp.eq.s32.totalorder %v79, %v400
    %vm403 = vcmp.eq.s32.totalorder %v80, %v400
    %vm404 = vcmp.eq.s32.totalorder %v81, %v400
    %vm405 = vcmp.eq.s32.totalorder %v82, %v400
    %vm406 = vcmp.eq.s32.totalorder %v83, %v400
    %vm407 = vcmp.eq.s32.totalorder %v84, %v400
    %vm408 = vcmp.eq.s32.totalorder %v85, %v400
    %v409 = vsub.f32 %v395, %v347
    %v410 = vsub.f32 %v396, %v348
    %v411 = vsub.f32 %v397, %v349
    %v412 = vsub.f32 %v398, %v350
    %v413 = vsub.f32 %v395, %v351
    %v414 = vsub.f32 %v396, %v352
    %v415 = vsub.f32 %v397, %v353
    %v416 = vsub.f32 %v398, %v354
    %v417 = vsel %vm401, %v409, 0.0
    %v418 = vsel %vm402, %v410, 0.0
    %v419 = vsel %vm403, %v411, 0.0
    %v420 = vsel %vm404, %v412, 0.0
    %v421 = vsel %vm405, %v413, 0.0
    %v422 = vsel %vm406, %v414, 0.0
    %v423 = vsel %vm407, %v415, 0.0
    %v424 = vsel %vm408, %v416, 0.0
    %v425 = vadd.f32 %v417, %v421
    %v426 = vadd.f32 %v418, %v422
    %v427 = vadd.f32 %v419, %v423
    %v428 = vadd.f32 %v420, %v424
    %v429 = vadd.f32 %v342, %v425
    %v430 = vadd.f32 %v343, %v426
    %v431 = vadd.f32 %v344, %v427
    %v432 = vadd.f32 %v345, %v428
    %v433 = vld [vmem:[#allocation7] sm:$0xff]
    %v434 = vld [vmem:[#allocation7 + $0x8] sm:$0xff]
    %v435 = vld [vmem:[#allocation7 + $0x10] sm:$0xff]
    %v436 = vld [vmem:[#allocation7 + $0x18] sm:$0xff]
    %v437 = vadd.f32 %v433, %v429
    %v438 = vadd.f32 %v434, %v430
    %v439 = vadd.f32 %v435, %v431
    %v440 = vadd.f32 %v436, %v432
    %441 = vst [vmem:[#allocation7] sm:$0xff] %v437
    %442 = vst [vmem:[#allocation7 + $0x8] sm:$0xff] %v438
    %443 = vst [vmem:[#allocation7 + $0x10] sm:$0xff] %v439
    %444 = vst [vmem:[#allocation7 + $0x18] sm:$0xff] %v440
    // Predicated region
    $region22: #{tpu_custom_call.1} parent=1 // pred_check
      %p445 = pneg %p55
    $region23: #{tpu_custom_call.1} parent=1 // pred_check_branch
      %447 = sbr.rel (%p445) target = $region25
    $region24: #{tpu_custom_call.1} parent=1 // pred_region
      %vm448 = vcmp.ne.s32.totalorder %v78, 255
      %vm449 = vcmp.ne.s32.totalorder %v79, 255
      %vm450 = vcmp.ne.s32.totalorder %v80, 255
      %vm451 = vcmp.ne.s32.totalorder %v81, 255
      %vm452 = vcmp.ne.s32.totalorder %v82, 255
      %vm453 = vcmp.ne.s32.totalorder %v83, 255
      %vm454 = vcmp.ne.s32.totalorder %v84, 255
      %vm455 = vcmp.ne.s32.totalorder %v85, 255
      %s456 = scalar_lea.vmem [#allocation7], 32
      %v457 = vld [vmem:[%s456] sm:$0xff]
      %v458 = vld [vmem:[%s456 + $0x8] sm:$0xff]
      %v459 = vld [vmem:[%s456 + $0x10] sm:$0xff]
      %v460 = vld [vmem:[%s456 + $0x18] sm:$0xff]
      %v461 = vsel %vm448, 1, 0
      %v462 = vsel %vm449, 1, 0
      %v463 = vsel %vm450, 1, 0
      %v464 = vsel %vm451, 1, 0
      %v465 = vsel %vm452, 1, 0
      %v466 = vsel %vm453, 1, 0
      %v467 = vsel %vm454, 1, 0
      %v468 = vsel %vm455, 1, 0
      %v469 = vcvt.s32.f32 %v461
      %v470 = vcvt.s32.f32 %v462
      %v471 = vcvt.s32.f32 %v463
      %v472 = vcvt.s32.f32 %v464
      %v473 = vcvt.s32.f32 %v465
      %v474 = vcvt.s32.f32 %v466
      %v475 = vcvt.s32.f32 %v467
      %v476 = vcvt.s32.f32 %v468
      %v477 = vadd.f32 %v469, %v473
      %v478 = vadd.f32 %v470, %v474
      %v479 = vadd.f32 %v471, %v475
      %v480 = vadd.f32 %v472, %v476
      %v481 = vadd.f32 %v457, %v477
      %v482 = vadd.f32 %v458, %v478
      %v483 = vadd.f32 %v459, %v479
      %v484 = vadd.f32 %v460, %v480
      %485 = vst [vmem:[%s456] sm:$0xff] %v481
      %486 = vst [vmem:[%s456 + $0x8] sm:$0xff] %v482
      %487 = vst [vmem:[%s456 + $0x10] sm:$0xff] %v483
      %488 = vst [vmem:[%s456 + $0x18] sm:$0xff] %v484
    $region25: #{tpu_custom_call.1} parent=1 // pred_fallthru
      _
    // Predicated region
    $region26: #{tpu_custom_call.1} parent=1 // pred_check
      _
    $region27: #{tpu_custom_call.1} parent=1 // pred_check_branch
      %490 = sbr.rel (0) target = $region29
    $region28: #{tpu_custom_call.1} parent=1 // pred_region
      %492 = vsyncadd [#allocation4], 0
      %s493 = sshll.u32 [#allocation7], 4
      %s494 = int_to_ptr.vmem [resolvable:$true] %s493
      %s495 = sshll.u32 %s2, 4
      %s496 = int_to_ptr.hbm [resolvable:$true] %s495
      %501 = dma.vmem_to_hbm [thread:$0]  %s494, 1024, %s496, [#allocation4], 128, 128, 8
    $region29: #{tpu_custom_call.1} parent=1 // pred_fallthru
      _
    // Predicated region
    $region30: #{tpu_custom_call.1} parent=1 // pred_check
      _
    $region31: #{tpu_custom_call.1} parent=1 // pred_check_branch
      %503 = sbr.rel (0) target = $region33
    $region32: #{tpu_custom_call.1} parent=1 // pred_region
      %505 = dma.done [#allocation4], 1024
    $region33: #{tpu_custom_call.1} parent=1 // pred_fallthru
      _
    %506 = vsyncpa [#allocation3], 1
    %507 = vsyncpa [#allocation6], 1
    %508 = vsyncpa [#allocation4], 1

</llo_original>
